<compile_context>
chip_gen: v5e
topology: v5e:2x2
jax: 0.10.0
libtpu: 0.0.40
codegen_flags: <defaults>
</compile_context>

<pallas_src>
import math

import jax
import jax.numpy as jnp
from jax.experimental import pallas as pl
from jax.experimental.pallas import tpu as pltpu

_INV_SQRT2 = 1.0 / math.sqrt(2.0)


# --------------------------------------------------------------------------- #
# Kernel
# --------------------------------------------------------------------------- #
def mlp_geglu_kernel(x_ref, w_in_ref, w_gate_ref, b_in_ref, b_gate_ref,
                     w_proj_ref, b_proj_ref, o_ref, acc_ref, x_bf_ref):
    """One (M-tile, H-chunk) grid step of the fused GEGLU MLP.

    x_ref:      (TM, C)  f32   activation tile (resident across the h axis)
    w_in_ref:   (C, TH)  bf16  first  half of c_fc (pass-through branch)
    w_gate_ref: (C, TH)  bf16  second half of c_fc (gate branch)
    b_in_ref:   (1, TH)  f32
    b_gate_ref: (1, TH)  f32
    w_proj_ref: (TH, C)  bf16  c_proj chunk
    b_proj_ref: (1, C)   f32
    o_ref:      (TM, C)        output tile (written once, at the last h step)
    acc_ref:    (TM, C)  f32   proj accumulator (VMEM scratch)
    x_bf_ref:   (TM, C)  bf16  cached bf16 copy of the x tile (VMEM scratch)
    """
    h = pl.program_id(1)
    nh = pl.num_programs(1)

    @pl.when(h == 0)
    def _init():
        # Cast x -> bf16 once per M tile (instead of a separate un-fused XLA
        # pass in the wrapper, which would re-read/write all of x in HBM).
        x_bf_ref[...] = x_ref[...].astype(x_bf_ref.dtype)
        acc_ref[...] = jnp.zeros_like(acc_ref)

    x = x_bf_ref[...]  # bf16 straight onto the MXU

    # c_fc for this H chunk, already split into the two GEGLU halves.
    h_in = jnp.dot(x, w_in_ref[...], preferred_element_type=jnp.float32)
    h_in = h_in + b_in_ref[...]
    gates = jnp.dot(x, w_gate_ref[...], preferred_element_type=jnp.float32)
    gates = gates + b_gate_ref[...]

    # Exact (erf) GELU in f32, matching torch F.gelu(approximate='none').
    gelu_gates = 0.5 * gates * (1.0 + jax.lax.erf(gates * _INV_SQRT2))
    a = (gelu_gates * h_in).astype(w_proj_ref.dtype)  # bf16 back onto the MXU

    # Partial c_proj contribution of this H chunk (f32 accumulate).
    acc_ref[...] += jnp.dot(a, w_proj_ref[...], preferred_element_type=jnp.float32)

    @pl.when(h == nh - 1)
    def _finalize():
        # b_proj is added exactly once, in the finalize branch.
        o_ref[...] = (acc_ref[...] + b_proj_ref[...]).astype(o_ref.dtype)
        # dropout(p=0.0) is the identity.
        # TODO(synk): nonzero-p dropout would need pltpu.prng_seed/prng_random_bits.


# --------------------------------------------------------------------------- #
# Tile selection / VMEM budgeting
# --------------------------------------------------------------------------- #
def _vmem_capacity_bytes() -> int:
    """Per-core VMEM capacity; conservative 64 MiB (v7x per-TC) fallback."""
    try:
        cap = getattr(pltpu.get_tpu_info(), "vmem_capacity_bytes", None)
        if cap:
            return int(cap)
    except Exception:  # off-TPU / older runtimes
        pass
    return 64 * 1024 * 1024


def _estimate_vmem_bytes(tm: int, th: int, C: int, H: int) -> int:
    f32, bf16 = 4, 2
    # x-in + out tiles, double-buffered by the pipeline.
    io = 2 * tm * C * f32 + 2 * tm * C * f32
    # Weights/biases for ONE H chunk.  They stream along h so the pipeline
    # double-buffers them; when TH == H they are fetched exactly once.
    weights = 2 * (2 * C * th * bf16 + th * C * bf16 + 2 * th * f32 + C * f32)
    # Persistent scratch: f32 proj accumulator + cached bf16 x tile.
    scratch = tm * C * f32 + tm * C * bf16
    # Live f32 intermediates in the body (h_in, gates, gelu*h_in).
    temps = 3 * tm * th * f32
    return io + weights + scratch + temps


def _tm_candidates(M: int):
    cands = [M] if M <= 1024 else []          # full-M tile for small inputs
    for t in (1024, 512, 256, 128, 64, 32, 16, 8):
        if t < M:
            cands.append(t)
    return cands


def _th_candidates(H: int):
    cands = [H]                               # TH == H -> weight-resident path
    for t in (4096, 2048, 1024, 512, 256, 128):
        if t < H:
            cands.append(t)
    return cands


def _select_tiles(M: int, C: int, H: int, vmem_cap: int):
    """Pick (TM, TH) so the working set fits ~70% of per-core VMEM.

    Prefer TH = H (weight-resident, single reduction step) as long as an
    MXU-friendly TM (>= 256) still fits; otherwise shrink TH (multiples of
    128/256) before shrinking TM below 256.
    """
    budget = int(vmem_cap * 0.70)
    best = None
    for th in _th_candidates(H):
        for tm in _tm_candidates(M):          # largest first
            if _estimate_vmem_bytes(tm, th, C, H) <= budget:
                if tm >= 256 or tm == M:
                    return tm, th
                if best is None:
                    best = (tm, th)
                break                          # try a smaller TH for a bigger TM
    if best is not None:
        return best
    return _tm_candidates(M)[-1], _th_candidates(H)[-1]


# --------------------------------------------------------------------------- #
# Wrapper
# --------------------------------------------------------------------------- #
def prepare_mlp_params(w_fc, b_fc, w_proj, b_proj):
    """One-time weight prep (split c_fc into GEGLU halves, cast to bf16).

    Call this at init / checkpoint-load time so the per-step forward does not
    run extra full-weight HBM read+write passes.
    w_fc: (C, 2H), b_fc: (1, 2H), w_proj: (H, C), b_proj: (1, C), all (in, out).
    """
    H = w_fc.shape[1] // 2
    return dict(
        w_in=jnp.asarray(w_fc[:, :H], dtype=jnp.bfloat16),
        w_gate=jnp.asarray(w_fc[:, H:], dtype=jnp.bfloat16),
        b_in=jnp.asarray(b_fc[:, :H], dtype=jnp.float32),
        b_gate=jnp.asarray(b_fc[:, H:], dtype=jnp.float32),
        w_proj=jnp.asarray(w_proj, dtype=jnp.bfloat16),
        b_proj=jnp.asarray(b_proj, dtype=jnp.float32),
    )


def mlp_forward(x, params):
    """x: (B, T, C) f32; params from prepare_mlp_params()."""
    B, T, C = x.shape
    H = params["w_in"].shape[1]
    M = B * T

    vmem_cap = _vmem_capacity_bytes()
    TM, TH = _select_tiles(M, C, H, vmem_cap)
    n_i = pl.cdiv(M, TM)
    n_h = pl.cdiv(H, TH)
    grid = (n_i, n_h)

    x2d = x.reshape(M, C)  # metadata-only; bf16 cast happens inside the kernel

    # Scoped-VMEM limit: use most of the chip (v5e/v6e ~115 of 128 MiB,
    # v7x ~57 of 64 MiB), never less than 32 MiB.
    vmem_limit = int(min(0.90 * vmem_cap,
                         max(32 * 1024 * 1024,
                             2 * _estimate_vmem_bytes(TM, TH, C, H))))

    weight_bytes = 3 * C * H * 2 + (2 * H + C) * 4
    bytes_accessed = (M * C * 4                                   # x in (f32)
                      + M * C * 4                                 # out (f32)
                      + (weight_bytes if n_h == 1 else n_i * weight_bytes))

    out2d = pl.pallas_call(
        mlp_geglu_kernel,
        out_shape=jax.ShapeDtypeStruct((M, C), x.dtype),
        grid=grid,
        in_specs=[
            pl.BlockSpec((TM, C), lambda i, h: (i, 0)),   # x: resident across h
            pl.BlockSpec((C, TH), lambda i, h: (0, h)),   # w_in chunk
            pl.BlockSpec((C, TH), lambda i, h: (0, h)),   # w_gate chunk
            pl.BlockSpec((1, TH), lambda i, h: (0, h)),   # b_in chunk
            pl.BlockSpec((1, TH), lambda i, h: (0, h)),   # b_gate chunk
            pl.BlockSpec((TH, C), lambda i, h: (h, 0)),   # w_proj chunk
            pl.BlockSpec((1, C), lambda i, h: (0, 0)),    # b_proj (constant)
        ],
        out_specs=pl.BlockSpec((TM, C), lambda i, h: (i, 0)),
        scratch_shapes=[
            pltpu.VMEM((TM, C), jnp.float32),   # proj accumulator
            pltpu.VMEM((TM, C), jnp.bfloat16),  # cached bf16 x tile
        ],
        compiler_params=pltpu.CompilerParams(
            dimension_semantics=("parallel", "arbitrary"),
            vmem_limit_bytes=vmem_limit,
        ),
        cost_estimate=pl.CostEstimate(
            flops=6 * M * C * H,
            transcendentals=M * H,
            bytes_accessed=bytes_accessed),
    )(x2d, params["w_in"], params["w_gate"], params["b_in"],
      params["b_gate"], params["w_proj"], params["b_proj"])

    return out2d.reshape(B, T, C)


# --------------------------------------------------------------------------- #
# Reference + test
# --------------------------------------------------------------------------- #
def reference_forward(x, w_fc, b_fc, w_proj, b_proj):
    """Pure-JAX f32 reference (matches the PyTorch MLP with GEGLU, dropout=0)."""
    h = jnp.einsum("btc,cd->btd", x, w_fc) + b_fc[0]
    H = h.shape[-1] // 2
    x_half, gates = h[..., :H], h[..., H:]
    a = 0.5 * gates * (1.0 + jax.lax.erf(gates * _INV_SQRT2)) * x_half
    return jnp.einsum("bth,hc->btc", a, w_proj) + b_proj[0]


if __name__ == "__main__":
    # GPTConfig-equivalent: n_embd=32, use_geglu=True, bias=True, dropout=0.0.
    # NOTE: C=32 is a toy size — output last dim < 128 lanes means masked
    # (vst.msk) stores and a shallow MXU K-depth; real transformer C (>=128,
    # ideally a multiple of 256 on v6e/v7x) is the representative regime.
    B, T, C = 2, 8, 32
    hidden = 4 * C          # 128
    fc_out = 2 * hidden     # 256 (GEGLU doubles the fc output)

    key = jax.random.PRNGKey(0)
    k_x, k_wfc, k_bfc, k_wp, k_bp = jax.random.split(key, 5)

    x = jax.random.normal(k_x, (B, T, C), dtype=jnp.float32)

    # Deterministic init, stored as (in, out) for the kernel (PyTorch nn.Linear
    # stores (out, in); pre-transposed so the kernel computes x @ W + b).
    w_fc = jax.random.normal(k_wfc, (C, fc_out), dtype=jnp.float32) * (1.0 / math.sqrt(C))
    b_fc = jax.random.normal(k_bfc, (1, fc_out), dtype=jnp.float32) * 0.01
    w_proj = jax.random.normal(k_wp, (hidden, C), dtype=jnp.float32) * (1.0 / math.sqrt(hidden))
    b_proj = jax.random.normal(k_bp, (1, C), dtype=jnp.float32) * 0.01

    params = prepare_mlp_params(w_fc, b_fc, w_proj, b_proj)  # one-time weight prep
    out = mlp_forward(x, params)
    out = jax.block_until_ready(out)

    ref = reference_forward(x, w_fc, b_fc, w_proj, b_proj)
    assert out.shape == (B, T, C)
    # Tolerance loosened vs the pure-f32 path: MXU operands are bf16 (f32 accum).
    assert jnp.allclose(out, ref, atol=2e-2, rtol=2e-2), "mismatch vs reference"

    print("KERNEL_OK")
</pallas_src>

<mosaic_0001>
module attributes {stable_mosaic.version = 11 : i64} {
  func.func @mlp_geglu_kernel(%arg0: i32, %arg1: i32, %arg2: memref<16x32xf32, #tpu.memory_space<vmem>>, %arg3: memref<32x128xbf16, #tpu.memory_space<vmem>>, %arg4: memref<32x128xbf16, #tpu.memory_space<vmem>>, %arg5: memref<1x128xf32, #tpu.memory_space<vmem>>, %arg6: memref<1x128xf32, #tpu.memory_space<vmem>>, %arg7: memref<128x32xbf16, #tpu.memory_space<vmem>>, %arg8: memref<1x32xf32, #tpu.memory_space<vmem>>, %arg9: memref<16x32xf32, #tpu.memory_space<vmem>>, %arg10: memref<16x32xf32, #tpu.memory_space<vmem>>, %arg11: memref<16x32xbf16, #tpu.memory_space<vmem>>) attributes {dimension_semantics = [#tpu.dimension_semantics<parallel>, #tpu.dimension_semantics<arbitrary>], iteration_bounds = array<i64: 1, 1>, scalar_prefetch = 0 : i64, scratch_operands = 2 : i64, tpu.core_type = #tpu.core_type<tc>, window_params = [{transform_indices = @transform_0, window_bounds = array<i64: 16, 32>}, {transform_indices = @transform_1, window_bounds = array<i64: 32, 128>}, {transform_indices = @transform_2, window_bounds = array<i64: 32, 128>}, {transform_indices = @transform_3, window_bounds = array<i64: 1, 128>}, {transform_indices = @transform_4, window_bounds = array<i64: 1, 128>}, {transform_indices = @transform_5, window_bounds = array<i64: 128, 32>}, {pipeline_mode = #tpu.pipeline_mode<synchronous>, transform_indices = @transform_6, window_bounds = array<i64: 1, 32>}, {transform_indices = @transform_7, window_bounds = array<i64: 16, 32>}]} {
    %c0_i32 = arith.constant 0 : i32
    %0 = arith.cmpi eq, %arg1, %c0_i32 : i32
    %1 = arith.extui %0 : i1 to i32
    %c0_i32_0 = arith.constant 0 : i32
    %2 = arith.cmpi ne, %1, %c0_i32_0 : i32
    scf.if %2 {
      %c0_23 = arith.constant 0 : index
      %c0_24 = arith.constant 0 : index
      %32 = vector.load %arg2[%c0_23, %c0_24] : memref<16x32xf32, #tpu.memory_space<vmem>>, vector<16x32xf32>
      %33 = arith.truncf %32 : vector<16x32xf32> to vector<16x32xbf16>
      %c0_25 = arith.constant 0 : index
      %c0_26 = arith.constant 0 : index
      %34 = vector.load %arg11[%c0_25, %c0_26] : memref<16x32xbf16, #tpu.memory_space<vmem>>, vector<16x32xbf16>
      tpu.vector_store %arg11[%c0_25, %c0_26], %33 {strides = array<i32>} : memref<16x32xbf16, #tpu.memory_space<vmem>>, vector<16x32xbf16>,
      %cst_27 = arith.constant 0.000000e+00 : f32
      %35 = vector.broadcast %cst_27 : f32 to vector<16x32xf32>
      %c0_28 = arith.constant 0 : index
      %c0_29 = arith.constant 0 : index
      %36 = vector.load %arg10[%c0_28, %c0_29] : memref<16x32xf32, #tpu.memory_space<vmem>>, vector<16x32xf32>
      tpu.vector_store %arg10[%c0_28, %c0_29], %35 {strides = array<i32>} : memref<16x32xf32, #tpu.memory_space<vmem>>, vector<16x32xf32>,
    } else {
    }
    %c0 = arith.constant 0 : index
    %c0_1 = arith.constant 0 : index
    %3 = vector.load %arg11[%c0, %c0_1] : memref<16x32xbf16, #tpu.memory_space<vmem>>, vector<16x32xbf16>
    %c0_2 = arith.constant 0 : index
    %c0_3 = arith.constant 0 : index
    %4 = vector.load %arg3[%c0_2, %c0_3] : memref<32x128xbf16, #tpu.memory_space<vmem>>, vector<32x128xbf16>
    %cst = arith.constant dense<0.000000e+00> : vector<16x128xf32>
    %5 = tpu.matmul %3, %4, %cst {dimension_numbers = #tpu.dot_dimension_numbers<[1], [0], [0], [1], [0, 0, 1, 1], [], []>} : vector<16x32xbf16>, vector<32x128xbf16>, vector<16x128xf32> -> vector<16x128xf32>
    %c0_4 = arith.constant 0 : index
    %c0_5 = arith.constant 0 : index
    %6 = vector.load %arg5[%c0_4, %c0_5] : memref<1x128xf32, #tpu.memory_space<vmem>>, vector<1x128xf32>
    %7 = vector.broadcast %6 : vector<1x128xf32> to vector<16x128xf32>
    %8 = arith.addf %5, %7 : vector<16x128xf32>
    %c0_6 = arith.constant 0 : index
    %c0_7 = arith.constant 0 : index
    %9 = vector.load %arg4[%c0_6, %c0_7] : memref<32x128xbf16, #tpu.memory_space<vmem>>, vector<32x128xbf16>
    %cst_8 = arith.constant dense<0.000000e+00> : vector<16x128xf32>
    %10 = tpu.matmul %3, %9, %cst_8 {dimension_numbers = #tpu.dot_dimension_numbers<[1], [0], [0], [1], [0, 0, 1, 1], [], []>} : vector<16x32xbf16>, vector<32x128xbf16>, vector<16x128xf32> -> vector<16x128xf32>
    %c0_9 = arith.constant 0 : index
    %c0_10 = arith.constant 0 : index
    %11 = vector.load %arg6[%c0_9, %c0_10] : memref<1x128xf32, #tpu.memory_space<vmem>>, vector<1x128xf32>
    %12 = vector.broadcast %11 : vector<1x128xf32> to vector<16x128xf32>
    %13 = arith.addf %10, %12 : vector<16x128xf32>
    %cst_11 = arith.constant 5.000000e-01 : f32
    %14 = vector.broadcast %cst_11 : f32 to vector<16x128xf32>
    %15 = arith.mulf %14, %13 : vector<16x128xf32>
    %cst_12 = arith.constant 0.707106769 : f32
    %16 = vector.broadcast %cst_12 : f32 to vector<16x128xf32>
    %17 = arith.mulf %13, %16 : vector<16x128xf32>
    %18 = math.erf %17 : vector<16x128xf32>
    %cst_13 = arith.constant 1.000000e+00 : f32
    %19 = vector.broadcast %cst_13 : f32 to vector<16x128xf32>
    %20 = arith.addf %19, %18 : vector<16x128xf32>
    %21 = arith.mulf %15, %20 : vector<16x128xf32>
    %22 = arith.mulf %21, %8 : vector<16x128xf32>
    %23 = arith.truncf %22 : vector<16x128xf32> to vector<16x128xbf16>
    %c0_14 = arith.constant 0 : index
    %c0_15 = arith.constant 0 : index
    %24 = vector.load %arg10[%c0_14, %c0_15] : memref<16x32xf32, #tpu.memory_space<vmem>>, vector<16x32xf32>
    %c0_16 = arith.constant 0 : index
    %c0_17 = arith.constant 0 : index
    %25 = vector.load %arg7[%c0_16, %c0_17] : memref<128x32xbf16, #tpu.memory_space<vmem>>, vector<128x32xbf16>
    %cst_18 = arith.constant dense<0.000000e+00> : vector<16x32xf32>
    %26 = tpu.matmul %23, %25, %cst_18 {dimension_numbers = #tpu.dot_dimension_numbers<[1], [0], [0], [1], [0, 0, 1, 1], [], []>} : vector<16x128xbf16>, vector<128x32xbf16>, vector<16x32xf32> -> vector<16x32xf32>
    %27 = arith.addf %24, %26 : vector<16x32xf32>
    %c0_19 = arith.constant 0 : index
    %c0_20 = arith.constant 0 : index
    %28 = vector.load %arg10[%c0_19, %c0_20] : memref<16x32xf32, #tpu.memory_space<vmem>>, vector<16x32xf32>
    tpu.vector_store %arg10[%c0_19, %c0_20], %27 {strides = array<i32>} : memref<16x32xf32, #tpu.memory_space<vmem>>, vector<16x32xf32>,
    %c0_i32_21 = arith.constant 0 : i32
    %29 = arith.cmpi eq, %arg1, %c0_i32_21 : i32
    %30 = arith.extui %29 : i1 to i32
    %c0_i32_22 = arith.constant 0 : i32
    %31 = arith.cmpi ne, %30, %c0_i32_22 : i32
    scf.if %31 {
      %c0_23 = arith.constant 0 : index
      %c0_24 = arith.constant 0 : index
      %32 = vector.load %arg10[%c0_23, %c0_24] : memref<16x32xf32, #tpu.memory_space<vmem>>, vector<16x32xf32>
      %c0_25 = arith.constant 0 : index
      %c0_26 = arith.constant 0 : index
      %33 = vector.load %arg8[%c0_25, %c0_26] : memref<1x32xf32, #tpu.memory_space<vmem>>, vector<1x32xf32>
      %34 = vector.broadcast %33 : vector<1x32xf32> to vector<16x32xf32>
      %35 = arith.addf %32, %34 : vector<16x32xf32>
      %c0_27 = arith.constant 0 : index
      %c0_28 = arith.constant 0 : index
      %36 = vector.load %arg9[%c0_27, %c0_28] : memref<16x32xf32, #tpu.memory_space<vmem>>, vector<16x32xf32>
      tpu.vector_store %arg9[%c0_27, %c0_28], %35 {strides = array<i32>} : memref<16x32xf32, #tpu.memory_space<vmem>>, vector<16x32xf32>,
    } else {
    }
    return
  }
  func.func @transform_0(%arg0: i32, %arg1: i32) -> (i32, i32) {
    %c0_i32 = arith.constant 0 : i32
    %c0_i32_0 = arith.constant 0 : i32
    return %arg0, %c0_i32 : i32, i32
  }
  func.func @transform_1(%arg0: i32, %arg1: i32) -> (i32, i32) {
    %c0_i32 = arith.constant 0 : i32
    %c0_i32_0 = arith.constant 0 : i32
    return %c0_i32, %arg1 : i32, i32
  }
  func.func @transform_2(%arg0: i32, %arg1: i32) -> (i32, i32) {
    %c0_i32 = arith.constant 0 : i32
    %c0_i32_0 = arith.constant 0 : i32
    return %c0_i32, %arg1 : i32, i32
  }
  func.func @transform_3(%arg0: i32, %arg1: i32) -> (i32, i32) {
    %c0_i32 = arith.constant 0 : i32
    %c0_i32_0 = arith.constant 0 : i32
    return %c0_i32, %arg1 : i32, i32
  }
  func.func @transform_4(%arg0: i32, %arg1: i32) -> (i32, i32) {
    %c0_i32 = arith.constant 0 : i32
    %c0_i32_0 = arith.constant 0 : i32
    return %c0_i32, %arg1 : i32, i32
  }
  func.func @transform_5(%arg0: i32, %arg1: i32) -> (i32, i32) {
    %c0_i32 = arith.constant 0 : i32
    %c0_i32_0 = arith.constant 0 : i32
    return %arg1, %c0_i32 : i32, i32
  }
  func.func @transform_6(%arg0: i32, %arg1: i32) -> (i32, i32) {
    %c0_i32 = arith.constant 0 : i32
    %c0_i32_0 = arith.constant 0 : i32
    %c0_i32_1 = arith.constant 0 : i32
    return %c0_i32, %c0_i32_0 : i32, i32
  }
  func.func @transform_7(%arg0: i32, %arg1: i32) -> (i32, i32) {
    %c0_i32 = arith.constant 0 : i32
    %c0_i32_0 = arith.constant 0 : i32
    return %arg0, %c0_i32 : i32, i32
  }
}

</mosaic_0001>

<llo_original>
// kernel: tpu_custom_call.1
$region0: #{tpu_custom_call.1}
  #allocation0 [shape = 'u32[]', space=smem, size = 0x4, offset = 0x4, fixed_abs, tag = 'smem constant byte address 0x4 - core index']
  #allocation1 [shape = 'u32[72,128]{1,0:T(1,128)}', space=vmem, size = 0x9000, scoped, tag = 'internal scratch']
  #allocation2 [shape = 'f32[16,32]{1,0:T(8,128)}', space=vmem, size = 0x2000, scoped, tag = 'scratch operand']
  #allocation3 [shape = 'bf16[16,32]{1,0:T(8,128)(2,1)}', space=vmem, size = 0x1000, scoped, tag = 'scratch operand']
  %s0 = inlined_call_operand.vmem [shape: f32[16,32], index: 0, kind: input, shape index: {}]
  %s1 = inlined_call_operand.vmem [shape: bf16[32,128], index: 1, kind: input, shape index: {}]
  %s2 = inlined_call_operand.vmem [shape: bf16[32,128], index: 2, kind: input, shape index: {}]
  %s3 = inlined_call_operand.vmem [shape: f32[1,128], index: 3, kind: input, shape index: {}]
  %s4 = inlined_call_operand.vmem [shape: f32[1,128], index: 4, kind: input, shape index: {}]
  %s5 = inlined_call_operand.vmem [shape: bf16[128,32], index: 5, kind: input, shape index: {}]
  %s6 = inlined_call_operand.vmem [shape: f32[1,32], index: 6, kind: input, shape index: {}]
  %s7 = inlined_call_operand.hbm [shape: f32[16,32], index: 7, kind: output, shape index: {}]
  %s8 = sld [smem:[#allocation0]]
  $region46: #{tpu_custom_call.1} parent=0
    _
  %s10 = ssub.s32 1, %s8
  %s11 = scalar_select 0, %s10, %s8
  $region1: #{tpu_custom_call.1} parent=0
    #allocation4 [shape = 'u8[8192]{0}', space=vmem, size = 0x2000, scoped, tag = 'output window, operand 0, single buffered']
    #allocation5 [shape = 's32[1]{0}', space=sflag, size = 0x4, scoped, tag = 'scoped memory for tpu_custom_call.1']
    %12 = vsyncpa [#allocation5], 0
    // Predicated region
    $region2: #{tpu_custom_call.1} parent=1 // pred_check
      _
    $region3: #{tpu_custom_call.1} parent=1 // pred_check_branch
      %14 = sbr.rel (0) target = $region5
    $region4: #{tpu_custom_call.1} parent=1 // pred_region
      _
    $region5: #{tpu_custom_call.1} parent=1 // pred_fallthru
      _
    // Predicated region
    $region6: #{tpu_custom_call.1} parent=1 // pred_check
      _
    $region7: #{tpu_custom_call.1} parent=1 // pred_check_branch
      %16 = sbr.rel (0) target = $region9
    $region8: #{tpu_custom_call.1} parent=1 // pred_region
      _
    $region9: #{tpu_custom_call.1} parent=1 // pred_fallthru
      _
    // Predicated region
    $region10: #{tpu_custom_call.1} parent=1 // pred_check
      _
    $region11: #{tpu_custom_call.1} parent=1 // pred_check_branch
      %18 = sbr.rel (0) target = $region13
    $region12: #{tpu_custom_call.1} parent=1 // pred_region
      _
    $region13: #{tpu_custom_call.1} parent=1 // pred_fallthru
      _
    // Predicated region
    $region14: #{tpu_custom_call.1} parent=1 // pred_check
      _
    $region15: #{tpu_custom_call.1} parent=1 // pred_check_branch
      %20 = sbr.rel (0) target = $region17
    $region16: #{tpu_custom_call.1} parent=1 // pred_region
      _
    $region17: #{tpu_custom_call.1} parent=1 // pred_fallthru
      _
    // Predicated region
    $region18: #{tpu_custom_call.1} parent=1 // pred_check
      _
    $region19: #{tpu_custom_call.1} parent=1 // pred_check_branch
      %22 = sbr.rel (0) target = $region21
    $region20: #{tpu_custom_call.1} parent=1 // pred_region
      _
    $region21: #{tpu_custom_call.1} parent=1 // pred_fallthru
      _
    // Predicated region
    $region22: #{tpu_custom_call.1} parent=1 // pred_check
      _
    $region23: #{tpu_custom_call.1} parent=1 // pred_check_branch
      %24 = sbr.rel (0) target = $region25
    $region24: #{tpu_custom_call.1} parent=1 // pred_region
      _
    $region25: #{tpu_custom_call.1} parent=1 // pred_fallthru
      _
    // Predicated region
    $region26: #{tpu_custom_call.1} parent=1 // pred_check
      _
    $region27: #{tpu_custom_call.1} parent=1 // pred_check_branch
      %26 = sbr.rel (0) target = $region29
    $region28: #{tpu_custom_call.1} parent=1 // pred_region
      _
    $region29: #{tpu_custom_call.1} parent=1 // pred_fallthru
      _
    %p28 = scmp.eq.s32.totalorder 0, 0
    // Predicated region
    $region30: #{tpu_custom_call.1} parent=1 // pred_check
      %p29 = pneg %p28
    $region31: #{tpu_custom_call.1} parent=1 // pred_check_branch
      %31 = sbr.rel (%p29) target = $region33
    $region32: #{tpu_custom_call.1} parent=1 // pred_region
      %v32 = vld [vmem:[%s0] sm:$0xff]
      %v33 = vld [vmem:[%s0 + $0x8] sm:$0xff]
      %v34 = vpack.c.bf16 %v32, %v32
      %v35 = vpack.c.bf16 %v33, %v33
      %vm36 = vcmask 257024
      %37 = vst.msk [vmem:[#allocation3] sm:$0xf] %vm36, %v34
      %38 = vst.msk [vmem:[#allocation3 + $0x4] sm:$0xf] %vm36, %v35
      %vm39 = vcmask 261120
      %40 = vst.msk [vmem:[#allocation2] sm:$0xff] %vm39, 0.0
      %41 = vst.msk [vmem:[#allocation2 + $0x8] sm:$0xff] %vm39, 0.0
    $region33: #{tpu_custom_call.1} parent=1 // pred_fallthru
      _
    %v42 = vld [vmem:[#allocation3] sm:$0xf]
    %v43 = vld [vmem:[#allocation3 + $0x4] sm:$0xf]
    %v44 = vld [vmem:[%s1] sm:$0xf]
    %v45 = vld [vmem:[%s1 + $0x4] sm:$0xf]
    %v46 = vld [vmem:[%s1 + $0x8] sm:$0xf]
    %v47 = vld [vmem:[%s1 + $0xc] sm:$0xf]
    %v48 = vld [vmem:[%s3] sm:$0x1]
    %v50 = vperm.slane %v48, 0
    %v54 = vunpack.c.l.b16 %v42
    %v55 = vunpack.c.l.b16 %v43
    %v56 = vpack.c.b16 %v55, %v54
    %v61 = vunpack.c.l.b16 %v44
    %v62 = vunpack.c.l.b16 %v45
    %v63 = vunpack.c.l.b16 %v46
    %v64 = vunpack.c.l.b16 %v47
    %v65 = vpack.c.b16 %v62, %v61
    %v66 = vpack.c.b16 %v64, %v63
    %vm69 = vcmask 261120
    %v71 = vsel %vm69, %v56, 0
    %73 = vmatpush.bf16.msra.mxu0 0
    %74 = vmatpush.bf16.msra.mxu0 0
    %75 = vmatpush.bf16.msra.mxu0 0
    %76 = vmatpush.bf16.msra.mxu0 0
    %77 = vmatpush.bf16.msra.mxu0 0
    %78 = vmatpush.bf16.msra.mxu0 0
    %79 = vmatpush.bf16.msra.mxu0 %v66
    %80 = vmatpush.bf16.msra.mxu0 %v65
    %81 = vmatmul.bf16.gmra.mxu0 %v71
    %v82 = vpop.f32.mrf.mxu0
    %v83 = vadd.f32 %v50, %v82
    %v84 = vpop.f32.mrf.mxu0
    %v85 = vadd.f32 %v50, %v84
    %86 = vdwg.mxu0
    %v87 = vld [vmem:[%s2] sm:$0xf]
    %v88 = vld [vmem:[%s2 + $0x4] sm:$0xf]
    %v89 = vld [vmem:[%s2 + $0x8] sm:$0xf]
    %v90 = vld [vmem:[%s2 + $0xc] sm:$0xf]
    %v91 = vld [vmem:[%s4] sm:$0x1]
    %v93 = vperm.slane %v91, 0
    %v99 = vunpack.c.l.b16 %v87
    %v100 = vunpack.c.l.b16 %v88
    %v101 = vunpack.c.l.b16 %v89
    %v102 = vunpack.c.l.b16 %v90
    %v103 = vpack.c.b16 %v100, %v99
    %v104 = vpack.c.b16 %v102, %v101
    %107 = vmatpush.bf16.msra.mxu0 0
    %108 = vmatpush.bf16.msra.mxu0 0
    %109 = vmatpush.bf16.msra.mxu0 0
    %110 = vmatpush.bf16.msra.mxu0 0
    %111 = vmatpush.bf16.msra.mxu0 0
    %112 = vmatpush.bf16.msra.mxu0 0
    %113 = vmatpush.bf16.msra.mxu0 %v104
    %114 = vmatpush.bf16.msra.mxu0 %v103
    %115 = vmatmul.bf16.gmra.mxu0 %v71
    %v116 = vpop.f32.mrf.mxu0
    %v117 = vadd.f32 %v93, %v116
    %v118 = vpop.f32.mrf.mxu0
    %v119 = vadd.f32 %v93, %v118
    %120 = vdwg.mxu0
    %v121 = vmul.f32 %v117, 0.5
    %v122 = vmul.f32 %v119, 0.5
    %v123 = vmul.f32 %v117, 0.70710677
    %v124 = vmul.f32 %v119, 0.70710677
    %v125 = vmul.f32 %v123, %v123
    %v126 = vmin.f32 16.0, %v125
    %v127 = vmul.f32 %v126, 2.1237322e-06
    %v128 = vadd.f32 %v127, 0.00028619796
    %v129 = vmul.f32 %v126, %v128
    %v130 = vadd.f32 %v129, 0.0036580483
    %v131 = vmul.f32 %v126, %v130
    %v132 = vadd.f32 %v131, 0.05243302
    %v133 = vmul.f32 %v126, %v132
    %v134 = vadd.f32 %v133, 0.18741608
    %v135 = vmul.f32 %v126, %v134
    %v136 = vadd.f32 %v135, 1.1283791
    %v137 = vmul.f32 %v123, %v136
    %v138 = vmul.f32 %v126, 3.8918573e-05
    %v139 = vadd.f32 %v138, 0.001143296
    %v140 = vmul.f32 %v126, %v139
    %v141 = vadd.f32 %v140, 0.014752088
    %v142 = vmul.f32 %v126, %v141
    %v143 = vadd.f32 %v142, 0.112945676
    %v144 = vmul.f32 %v126, %v143
    %v145 = vadd.f32 %v144, 0.4994258
    %v146 = vmul.f32 %v126, %v145
    %v147 = vadd.f32 %v146, 1.0
    %v148 = vrcp.pop %v147
    %v149 = vmul.f32 %v147, %v148
    %v150 = vsub.f32 1.0, %v149
    %v151 = vmul.f32 %v148, %v150
    %v152 = vadd.f32 %v148, %v151
    %vm153 = vweird.f32 %v147
    %vm154 = vweird.f32 %v148
    %vm155 = vmor %vm153, %vm154
    %v156 = vsel %vm155, %v148, %v152
    %v157 = vand.u32 2147483647, %v147
    %vm158 = vcmp.eq.f32.partialorder %v157, 8.507059e+37
    %v159 = vand.u32 %v147, 2147483648
    %v160 = vor.u32 1.1754944e-38, %v159
    %v161 = vsel %vm158, %v160, %v156
    %v162 = vmul.f32 %v137, %v161
    %v163 = vmin.f32 %v162, 1.0
    %v164 = vmax.f32 %v163, -1.0
    %v165 = vmul.f32 %v124, %v124
    %v166 = vmin.f32 16.0, %v165
    %v167 = vmul.f32 %v166, 2.1237322e-06
    %v168 = vadd.f32 %v167, 0.00028619796
    %v169 = vmul.f32 %v166, %v168
    %v170 = vadd.f32 %v169, 0.0036580483
    %v171 = vmul.f32 %v166, %v170
    %v172 = vadd.f32 %v171, 0.05243302
    %v173 = vmul.f32 %v166, %v172
    %v174 = vadd.f32 %v173, 0.18741608
    %v175 = vmul.f32 %v166, %v174
    %v176 = vadd.f32 %v175, 1.1283791
    %v177 = vmul.f32 %v124, %v176
    %v178 = vmul.f32 %v166, 3.8918573e-05
    %v179 = vadd.f32 %v178, 0.001143296
    %v180 = vmul.f32 %v166, %v179
    %v181 = vadd.f32 %v180, 0.014752088
    %v182 = vmul.f32 %v166, %v181
    %v183 = vadd.f32 %v182, 0.112945676
    %v184 = vmul.f32 %v166, %v183
    %v185 = vadd.f32 %v184, 0.4994258
    %v186 = vmul.f32 %v166, %v185
    %v187 = vadd.f32 %v186, 1.0
    %v188 = vrcp.pop %v187
    %v189 = vmul.f32 %v187, %v188
    %v190 = vsub.f32 1.0, %v189
    %v191 = vmul.f32 %v188, %v190
    %v192 = vadd.f32 %v188, %v191
    %vm193 = vweird.f32 %v187
    %vm194 = vweird.f32 %v188
    %vm195 = vmor %vm193, %vm194
    %v196 = vsel %vm195, %v188, %v192
    %v197 = vand.u32 2147483647, %v187
    %vm198 = vcmp.eq.f32.partialorder %v197, 8.507059e+37
    %v199 = vand.u32 %v187, 2147483648
    %v200 = vor.u32 1.1754944e-38, %v199
    %v201 = vsel %vm198, %v200, %v196
    %v202 = vmul.f32 %v177, %v201
    %v203 = vmin.f32 %v202, 1.0
    %v204 = vmax.f32 %v203, -1.0
    %v205 = vadd.f32 %v164, 1.0
    %v206 = vadd.f32 %v204, 1.0
    %v207 = vmul.f32 %v121, %v205
    %v208 = vmul.f32 %v122, %v206
    %v209 = vmul.f32 %v207, %v83
    %v210 = vmul.f32 %v208, %v85
    %v211 = vpack.c.bf16 %v210, %v209
    %v212 = vld [vmem:[#allocation2] sm:$0xff]
    %v213 = vld [vmem:[#allocation2 + $0x8] sm:$0xff]
    %v214 = vld [vmem:[%s5] sm:$0xf]
    %v215 = vld [vmem:[%s5 + $0x4] sm:$0xf]
    %v216 = vld [vmem:[%s5 + $0x8] sm:$0xf]
    %v217 = vld [vmem:[%s5 + $0xc] sm:$0xf]
    %v218 = vld [vmem:[%s5 + $0x10] sm:$0xf]
    %v219 = vld [vmem:[%s5 + $0x14] sm:$0xf]
    %v220 = vld [vmem:[%s5 + $0x18] sm:$0xf]
    %v221 = vld [vmem:[%s5 + $0x1c] sm:$0xf]
    %v222 = vld [vmem:[%s5 + $0x20] sm:$0xf]
    %v223 = vld [vmem:[%s5 + $0x24] sm:$0xf]
    %v224 = vld [vmem:[%s5 + $0x28] sm:$0xf]
    %v225 = vld [vmem:[%s5 + $0x2c] sm:$0xf]
    %v226 = vld [vmem:[%s5 + $0x30] sm:$0xf]
    %v227 = vld [vmem:[%s5 + $0x34] sm:$0xf]
    %v228 = vld [vmem:[%s5 + $0x38] sm:$0xf]
    %v229 = vld [vmem:[%s5 + $0x3c] sm:$0xf]
    %v246 = vunpack.c.l.b16 %v214
    %v247 = vunpack.c.l.b16 %v215
    %v248 = vunpack.c.l.b16 %v216
    %v249 = vunpack.c.l.b16 %v217
    %v250 = vunpack.c.l.b16 %v218
    %v251 = vunpack.c.l.b16 %v219
    %v252 = vunpack.c.l.b16 %v220
    %v253 = vunpack.c.l.b16 %v221
    %v254 = vunpack.c.l.b16 %v222
    %v255 = vunpack.c.l.b16 %v223
    %v256 = vunpack.c.l.b16 %v224
    %v257 = vunpack.c.l.b16 %v225
    %v258 = vunpack.c.l.b16 %v226
    %v259 = vunpack.c.l.b16 %v227
    %v260 = vunpack.c.l.b16 %v228
    %v261 = vunpack.c.l.b16 %v229
    %v262 = vpack.c.b16 %v247, %v246
    %v263 = vpack.c.b16 %v249, %v248
    %v264 = vpack.c.b16 %v251, %v250
    %v265 = vpack.c.b16 %v253, %v252
    %v266 = vpack.c.b16 %v255, %v254
    %v267 = vpack.c.b16 %v257, %v256
    %v268 = vpack.c.b16 %v259, %v258
    %v269 = vpack.c.b16 %v261, %v260
    %278 = vmatpush.bf16.msra.mxu0 %v269
    %279 = vmatpush.bf16.msra.mxu0 %v268
    %280 = vmatpush.bf16.msra.mxu0 %v267
    %281 = vmatpush.bf16.msra.mxu0 %v266
    %282 = vmatpush.bf16.msra.mxu0 %v265
    %283 = vmatpush.bf16.msra.mxu0 %v264
    %284 = vmatpush.bf16.msra.mxu0 %v263
    %285 = vmatpush.bf16.msra.mxu0 %v262
    %286 = vmatmul.bf16.gmra.mxu0 %v211
    %v287 = vpop.f32.mrf.mxu0
    %v288 = vadd.f32 0.0, %v287
    %v289 = vpop.f32.mrf.mxu0
    %v290 = vadd.f32 0.0, %v289
    %291 = vdwg.mxu0
    %v292 = vadd.f32 %v212, %v288
    %v293 = vadd.f32 %v213, %v290
    %294 = vst.msk [vmem:[#allocation2] sm:$0xff] %vm69, %v292
    %295 = vst.msk [vmem:[#allocation2 + $0x8] sm:$0xff] %vm69, %v293
    // Predicated region
    $region34: #{tpu_custom_call.1} parent=1 // pred_check
      %p296 = pneg %p28
    $region35: #{tpu_custom_call.1} parent=1 // pred_check_branch
      %298 = sbr.rel (%p296) target = $region37
    $region36: #{tpu_custom_call.1} parent=1 // pred_region
      %v299 = vld [vmem:[#allocation2] sm:$0xff]
      %v300 = vld [vmem:[#allocation2 + $0x8] sm:$0xff]
      %v301 = vld [vmem:[%s6] sm:$0x1]
      %v303 = vperm.slane %v301, 0
      %v305 = vadd.f32 %v299, %v303
      %v306 = vadd.f32 %v300, %v303
      %307 = vst.msk [vmem:[#allocation4] sm:$0xff] %vm69, %v305
      %308 = vst.msk [vmem:[#allocation4 + $0x8] sm:$0xff] %vm69, %v306
    $region37: #{tpu_custom_call.1} parent=1 // pred_fallthru
      _
    // Predicated region
    $region38: #{tpu_custom_call.1} parent=1 // pred_check
      _
    $region39: #{tpu_custom_call.1} parent=1 // pred_check_branch
      %310 = sbr.rel (0) target = $region41
    $region40: #{tpu_custom_call.1} parent=1 // pred_region
      %312 = vsyncadd [#allocation5], 0
      %s313 = sshll.u32 [#allocation4], 4
      %s314 = int_to_ptr.vmem [resolvable:$true] %s313
      %s315 = sshll.u32 %s7, 4
      %s316 = int_to_ptr.hbm [resolvable:$true] %s315
      %321 = dma.vmem_to_hbm [thread:$0]  %s314, 256, %s316, [#allocation5], 128, 128, 8
    $region41: #{tpu_custom_call.1} parent=1 // pred_fallthru
      _
    // Predicated region
    $region42: #{tpu_custom_call.1} parent=1 // pred_check
      _
    $region43: #{tpu_custom_call.1} parent=1 // pred_check_branch
      %323 = sbr.rel (0) target = $region45
    $region44: #{tpu_custom_call.1} parent=1 // pred_region
      %325 = dma.done [#allocation5], 256
    $region45: #{tpu_custom_call.1} parent=1 // pred_fallthru
      _
    %326 = vsyncpa [#allocation5], 1

</llo_original>
